<compile_context>
chip_gen: v7x
topology: tpu7x:2x2x1
jax: 0.10.0
libtpu: 0.0.40
codegen_flags: <defaults>
</compile_context>

<pallas_src>
import math
import functools

import jax
import jax.numpy as jnp
from jax.experimental import pallas as pl
from jax.experimental.pallas import tpu as pltpu


def _round_up(x, m):
    return ((x + m - 1) // m) * m


def _vmem_limit_bytes():
    """Generation-aware VMEM limit: ~75% of physical, clamped to [32, 100] MiB."""
    cap = 64 * 1024 * 1024  # conservative fallback (v7x per-TC VMEM)
    try:
        info = pltpu.get_tpu_info()
        cap = int(getattr(info, "vmem_capacity_bytes", cap))
    except Exception:
        pass
    return max(32 * 1024 * 1024, min(int(cap * 0.75), 100 * 1024 * 1024))


def _gcn_kernel(adj_ref, x_ref, h0_ref, w_ref, o_ref, hi_acc, *,
                alpha, theta, tk, x_resident):
    # adj_ref : (tm, tk)           tile of the (dense) adjacency
    # x_ref   : (Kp, Fp) resident  OR (tk, Fp) streamed k-tile of node features
    # h0_ref  : (tm, Fp)           row-tile of the initial residual h0
    # w_ref   : (Fp, Fp)           plain weight W (theta blend done on VPU in f32)
    # o_ref   : (tm, Fp)           output row-tile
    # hi_acc  : (tm, Fp)           f32 accumulator for hi = adj @ x
    k = pl.program_id(1)

    @pl.when(k == 0)
    def _init():
        hi_acc[...] = jnp.zeros_like(hi_acc)

    if x_resident:
        # Whole (padded) x lives in VMEM; take the current k-slice (lane-aligned start).
        x_blk = x_ref[pl.ds(pl.multiple_of(k * tk, tk), tk), :]
    else:
        x_blk = x_ref[...]

    hi_acc[...] += jnp.dot(adj_ref[...], x_blk, preferred_element_type=jnp.float32)

    @pl.when(k == pl.num_programs(1) - 1)
    def _finalize():
        # Blend + theta scaling in f32 on the VPU (free filler on a DMA-bound kernel).
        support = (1.0 - alpha) * hi_acc[...] + alpha * h0_ref[...].astype(jnp.float32)
        sw = jnp.dot(support.astype(w_ref.dtype), w_ref[...],
                     preferred_element_type=jnp.float32)
        o_ref[...] = (theta * sw + (1.0 - theta) * support).astype(o_ref.dtype)


def graph_convolution(inp, adj, h0, weight, *, lamda, alpha, l,
                      tm=512, tk=1024, compute_dtype=jnp.bfloat16,
                      x_resident=None):
    """Pallas GraphConvolution.forward (variant=False, residual=False).

    compute_dtype: streaming/matmul-operand dtype (default bf16; accumulation is
                   always f32).  Use jnp.float32 for a full-precision path.
    x_resident   : None = auto (resident if it fits VMEM), or force True/False.
    """
    N, F = inp.shape
    assert adj.shape == (N, N)
    assert h0.shape == (N, F)
    assert weight.shape == (F, F), "GCNII layer requires in_features == out_features"

    theta = float(math.log(lamda / l + 1.0))
    alpha = float(alpha)

    out_dtype = inp.dtype
    op_isz = jnp.dtype(compute_dtype).itemsize
    out_isz = jnp.dtype(out_dtype).itemsize

    # ---- tile / padding selection -------------------------------------------------
    Fp = _round_up(F, 128)                       # lane-dense features
    tm = max(8, min(tm, _round_up(N, 8)))        # sublane multiple
    tk = max(128, min(tk, _round_up(N, 128)))    # lane multiple

    # Megacore (v7x has 2 TensorCores): keep >= 2 tiles on the parallel row axis
    # when the graph is big enough to split.
    if (_round_up(N, tm) // tm) < 2 and N > 256:
        tm = max(128, 8 * ((_round_up(N, 8) // 2) // 8))

    vmem_limit = _vmem_limit_bytes()
    tile_budget = vmem_limit - (4 << 20)         # headroom for Mosaic internal scratch

    def _vmem_bytes(tm_, tk_, x_rows):
        # Conservative: assume double-buffering on every pipelined block.
        return (2 * tm_ * tk_ * op_isz           # adj tile
                + 2 * x_rows * Fp * op_isz       # x (resident rows or streamed tk rows)
                + 2 * tm_ * Fp * op_isz          # h0 row-tile
                + 2 * Fp * Fp * op_isz           # weight (invariant, DMA'd once)
                + 2 * tm_ * Fp * out_isz         # output row-tile
                + tm_ * Fp * 4)                  # f32 accumulator scratch

    # Shrink tiles (rarely needed) until the streamed-x configuration fits.
    while _vmem_bytes(tm, tk, tk) > tile_budget and tk > 128:
        tk = max(128, 128 * ((tk // 2) // 128))
    while _vmem_bytes(tm, tk, tk) > tile_budget and tm > 8:
        tm = max(8, 8 * ((tm // 2) // 8))

    Mp = _round_up(N, tm)                        # adj / h0 / output rows
    Kp = _round_up(N, tk)                        # adj cols == x rows

    if x_resident is None:
        x_resident = _vmem_bytes(tm, tk, Kp) <= tile_budget

    # ---- pad (per-axis, zero-fill => exact) & cast ---------------------------------
    def pad2(a, rows, cols):
        pr, pc = rows - a.shape[0], cols - a.shape[1]
        if pr or pc:
            a = jnp.pad(a, ((0, pr), (0, pc)))
        return a

    adj_p = pad2(adj, Mp, Kp).astype(compute_dtype)
    x_p = pad2(inp, Kp, Fp).astype(compute_dtype)
    h0_p = pad2(h0, Mp, Fp).astype(compute_dtype)
    w_p = pad2(weight, Fp, Fp).astype(compute_dtype)

    grid = (Mp // tm, Kp // tk)                  # reduction (k) axis last

    if x_resident:
        x_spec = pl.BlockSpec((Kp, Fp), lambda i, k: (0, 0))   # DMA'd once, sliced in-kernel
        x_reads = 1
    else:
        x_spec = pl.BlockSpec((tk, Fp), lambda i, k: (k, 0))   # streamed, re-read per row tile
        x_reads = grid[0]

    cost = pl.CostEstimate(
        flops=2 * Mp * Kp * Fp + 2 * Mp * Fp * Fp,
        transcendentals=0,
        bytes_accessed=int(
            Mp * Kp * op_isz                     # adjacency streamed once
            + Kp * Fp * op_isz * x_reads         # x
            + Mp * Fp * op_isz                   # h0
            + Fp * Fp * op_isz                   # weight
            + Mp * Fp * out_isz                  # output
        ),
    )

    kernel = functools.partial(_gcn_kernel, alpha=alpha, theta=theta,
                               tk=tk, x_resident=bool(x_resident))

    out_p = pl.pallas_call(
        kernel,
        out_shape=jax.ShapeDtypeStruct((Mp, Fp), out_dtype),
        grid_spec=pltpu.PrefetchScalarGridSpec(
            num_scalar_prefetch=0,
            grid=grid,
            in_specs=[
                pl.BlockSpec((tm, tk), lambda i, k: (i, k)),   # adj tile
                x_spec,                                        # x (resident or k-tile)
                pl.BlockSpec((tm, Fp), lambda i, k: (i, 0)),   # h0 row-tile
                pl.BlockSpec((Fp, Fp), lambda i, k: (0, 0)),   # weight (invariant)
            ],
            out_specs=pl.BlockSpec((tm, Fp), lambda i, k: (i, 0)),
            scratch_shapes=[pltpu.VMEM((tm, Fp), jnp.float32)],
        ),
        compiler_params=pltpu.CompilerParams(
            dimension_semantics=("parallel", "arbitrary"),
            vmem_limit_bytes=vmem_limit,
        ),
        cost_estimate=cost,
    )(adj_p, x_p, h0_p, w_p)

    return out_p[:N, :F]


def graph_convolution_ref(inp, adj, h0, weight, *, lamda, alpha, l):
    theta = math.log(lamda / l + 1.0)
    hi = adj @ inp
    support = (1.0 - alpha) * hi + alpha * h0
    return theta * (support @ weight) + (1.0 - theta) * support


def _make_problem(key, N, F):
    k_x, k_adj, k_h0, k_w = jax.random.split(key, 4)
    x = jax.random.normal(k_x, (N, F), dtype=jnp.float32)
    # symmetric, row-normalized dense "adjacency"
    a = jax.random.uniform(k_adj, (N, N), dtype=jnp.float32)
    a = 0.5 * (a + a.T) + jnp.eye(N, dtype=jnp.float32)
    adj = a / jnp.sum(a, axis=1, keepdims=True)
    h0 = jax.random.normal(k_h0, (N, F), dtype=jnp.float32)
    # reset_parameters(): uniform(-stdv, stdv), stdv = 1/sqrt(out_features)
    stdv = 1.0 / math.sqrt(F)
    w = jax.random.uniform(k_w, (F, F), dtype=jnp.float32, minval=-stdv, maxval=stdv)
    return x, adj, h0, w


if __name__ == "__main__":
    lamda, alpha, layer_idx = 0.5, 0.1, 1
    key = jax.random.PRNGKey(0)
    k1, k2 = jax.random.split(key)

    # ---- problem 1: N=128, F=64 (single-tile grid) --------------------------------
    x, adj, h0, w = _make_problem(k1, 128, 64)
    ref = graph_convolution_ref(x, adj, h0, w, lamda=lamda, alpha=alpha, l=layer_idx)

    # default path: bf16 operands, f32 accumulation
    out_bf16 = graph_convolution(x, adj, h0, w, lamda=lamda, alpha=alpha, l=layer_idx)
    out_bf16 = jax.block_until_ready(out_bf16)
    assert out_bf16.shape == (128, 64) and out_bf16.dtype == jnp.float32
    assert jnp.allclose(out_bf16, ref, atol=2e-2, rtol=2e-2), \
        float(jnp.max(jnp.abs(out_bf16 - ref)))

    # full-precision path
    out_f32 = graph_convolution(x, adj, h0, w, lamda=lamda, alpha=alpha, l=layer_idx,
                                compute_dtype=jnp.float32)
    out_f32 = jax.block_until_ready(out_f32)
    assert out_f32.shape == (128, 64) and out_f32.dtype == jnp.float32
    assert jnp.allclose(out_f32, ref, atol=2e-3, rtol=2e-3), \
        float(jnp.max(jnp.abs(out_f32 - ref)))

    # ---- problem 2: N=300, F=48 (multi-tile grid, per-axis padding) ---------------
    x2, adj2, h02, w2 = _make_problem(k2, 300, 48)
    ref2 = graph_convolution_ref(x2, adj2, h02, w2, lamda=lamda, alpha=alpha, l=layer_idx)

    # resident-x path (in-kernel pl.ds slicing over the k reduction)
    out2_res = graph_convolution(x2, adj2, h02, w2, lamda=lamda, alpha=alpha, l=layer_idx,
                                 tm=128, tk=128, compute_dtype=jnp.float32,
                                 x_resident=True)
    out2_res = jax.block_until_ready(out2_res)
    assert out2_res.shape == (300, 48)
    assert jnp.allclose(out2_res, ref2, atol=2e-3, rtol=2e-3), \
        float(jnp.max(jnp.abs(out2_res - ref2)))

    # streamed-x fallback path
    out2_str = graph_convolution(x2, adj2, h02, w2, lamda=lamda, alpha=alpha, l=layer_idx,
                                 tm=128, tk=128, compute_dtype=jnp.float32,
                                 x_resident=False)
    out2_str = jax.block_until_ready(out2_str)
    assert jnp.allclose(out2_str, ref2, atol=2e-3, rtol=2e-3), \
        float(jnp.max(jnp.abs(out2_str - ref2)))

    print("KERNEL_OK")
</pallas_src>

<mosaic_0001>
module attributes {stable_mosaic.version = 11 : i64} {
  func.func @_gcn_kernel(%arg0: i32, %arg1: i32, %arg2: memref<128x128xbf16, #tpu.memory_space<vmem>>, %arg3: memref<128x128xbf16, #tpu.memory_space<vmem>>, %arg4: memref<128x128xbf16, #tpu.memory_space<vmem>>, %arg5: memref<128x128xbf16, #tpu.memory_space<vmem>>, %arg6: memref<128x128xf32, #tpu.memory_space<vmem>>, %arg7: memref<128x128xf32, #tpu.memory_space<vmem>>) attributes {dimension_semantics = [#tpu.dimension_semantics<parallel>, #tpu.dimension_semantics<arbitrary>], iteration_bounds = array<i64: 1, 1>, scalar_prefetch = 0 : i64, scratch_operands = 1 : i64, tpu.core_type = #tpu.core_type<tc>, window_params = [{transform_indices = @transform_0, window_bounds = array<i64: 128, 128>}, {pipeline_mode = #tpu.pipeline_mode<synchronous>, transform_indices = @transform_1, window_bounds = array<i64: 128, 128>}, {transform_indices = @transform_2, window_bounds = array<i64: 128, 128>}, {pipeline_mode = #tpu.pipeline_mode<synchronous>, transform_indices = @transform_3, window_bounds = array<i64: 128, 128>}, {transform_indices = @transform_4, window_bounds = array<i64: 128, 128>}]} {
    %c0_i32 = arith.constant 0 : i32
    %0 = arith.cmpi eq, %arg1, %c0_i32 : i32
    %1 = arith.extui %0 : i1 to i32
    %c0_i32_0 = arith.constant 0 : i32
    %2 = arith.cmpi ne, %1, %c0_i32_0 : i32
    scf.if %2 {
      %cst_9 = arith.constant 0.000000e+00 : f32
      %15 = vector.broadcast %cst_9 : f32 to vector<128x128xf32>
      %c0_10 = arith.constant 0 : index
      %c0_11 = arith.constant 0 : index
      %16 = vector.load %arg7[%c0_10, %c0_11] : memref<128x128xf32, #tpu.memory_space<vmem>>, vector<128x128xf32>
      tpu.vector_store %arg7[%c0_10, %c0_11], %15 {strides = array<i32>} : memref<128x128xf32, #tpu.memory_space<vmem>>, vector<128x128xf32>,
    } else {
    }
    %c128_i32 = arith.constant 128 : i32
    %3 = arith.muli %arg1, %c128_i32 : i32
    %4 = tpu.assume_multiple %3, 128 : i32
    %5 = arith.index_cast %4 : i32 to index
    %c0 = arith.constant 0 : index
    %6 = vector.load %arg3[%5, %c0] : memref<128x128xbf16, #tpu.memory_space<vmem>>, vector<128x128xbf16>
    %c0_1 = arith.constant 0 : index
    %c0_2 = arith.constant 0 : index
    %7 = vector.load %arg7[%c0_1, %c0_2] : memref<128x128xf32, #tpu.memory_space<vmem>>, vector<128x128xf32>
    %c0_3 = arith.constant 0 : index
    %c0_4 = arith.constant 0 : index
    %8 = vector.load %arg2[%c0_3, %c0_4] : memref<128x128xbf16, #tpu.memory_space<vmem>>, vector<128x128xbf16>
    %cst = arith.constant dense<0.000000e+00> : vector<128x128xf32>
    %9 = tpu.matmul %8, %6, %cst {dimension_numbers = #tpu.dot_dimension_numbers<[1], [0], [0], [1], [0, 0, 1, 1], [], []>} : vector<128x128xbf16>, vector<128x128xbf16>, vector<128x128xf32> -> vector<128x128xf32>
    %10 = arith.addf %7, %9 : vector<128x128xf32>
    %c0_5 = arith.constant 0 : index
    %c0_6 = arith.constant 0 : index
    %11 = vector.load %arg7[%c0_5, %c0_6] : memref<128x128xf32, #tpu.memory_space<vmem>>, vector<128x128xf32>
    tpu.vector_store %arg7[%c0_5, %c0_6], %10 {strides = array<i32>} : memref<128x128xf32, #tpu.memory_space<vmem>>, vector<128x128xf32>,
    %c0_i32_7 = arith.constant 0 : i32
    %12 = arith.cmpi eq, %arg1, %c0_i32_7 : i32
    %13 = arith.extui %12 : i1 to i32
    %c0_i32_8 = arith.constant 0 : i32
    %14 = arith.cmpi ne, %13, %c0_i32_8 : i32
    scf.if %14 {
      %c0_9 = arith.constant 0 : index
      %c0_10 = arith.constant 0 : index
      %15 = vector.load %arg7[%c0_9, %c0_10] : memref<128x128xf32, #tpu.memory_space<vmem>>, vector<128x128xf32>
      %cst_11 = arith.constant 0.899999976 : f32
      %16 = vector.broadcast %cst_11 : f32 to vector<128x128xf32>
      %17 = arith.mulf %16, %15 : vector<128x128xf32>
      %c0_12 = arith.constant 0 : index
      %c0_13 = arith.constant 0 : index
      %18 = vector.load %arg4[%c0_12, %c0_13] : memref<128x128xbf16, #tpu.memory_space<vmem>>, vector<128x128xbf16>
      %19 = arith.extf %18 : vector<128x128xbf16> to vector<128x128xf32>
      %cst_14 = arith.constant 1.000000e-01 : f32
      %20 = vector.broadcast %cst_14 : f32 to vector<128x128xf32>
      %21 = arith.mulf %20, %19 : vector<128x128xf32>
      %22 = arith.addf %17, %21 : vector<128x128xf32>
      %23 = arith.truncf %22 : vector<128x128xf32> to vector<128x128xbf16>
      %c0_15 = arith.constant 0 : index
      %c0_16 = arith.constant 0 : index
      %24 = vector.load %arg5[%c0_15, %c0_16] : memref<128x128xbf16, #tpu.memory_space<vmem>>, vector<128x128xbf16>
      %cst_17 = arith.constant dense<0.000000e+00> : vector<128x128xf32>
      %25 = tpu.matmul %23, %24, %cst_17 {dimension_numbers = #tpu.dot_dimension_numbers<[1], [0], [0], [1], [0, 0, 1, 1], [], []>} : vector<128x128xbf16>, vector<128x128xbf16>, vector<128x128xf32> -> vector<128x128xf32>
      %cst_18 = arith.constant 0.405465096 : f32
      %26 = vector.broadcast %cst_18 : f32 to vector<128x128xf32>
      %27 = arith.mulf %26, %25 : vector<128x128xf32>
      %cst_19 = arith.constant 0.594534874 : f32
      %28 = vector.broadcast %cst_19 : f32 to vector<128x128xf32>
      %29 = arith.mulf %28, %22 : vector<128x128xf32>
      %30 = arith.addf %27, %29 : vector<128x128xf32>
      %c0_20 = arith.constant 0 : index
      %c0_21 = arith.constant 0 : index
      %31 = vector.load %arg6[%c0_20, %c0_21] : memref<128x128xf32, #tpu.memory_space<vmem>>, vector<128x128xf32>
      tpu.vector_store %arg6[%c0_20, %c0_21], %30 {strides = array<i32>} : memref<128x128xf32, #tpu.memory_space<vmem>>, vector<128x128xf32>,
    } else {
    }
    return
  }
  func.func @transform_0(%arg0: i32, %arg1: i32) -> (i32, i32) {
    %c0_i32 = arith.constant 0 : i32
    return %arg0, %arg1 : i32, i32
  }
  func.func @transform_1(%arg0: i32, %arg1: i32) -> (i32, i32) {
    %c0_i32 = arith.constant 0 : i32
    %c0_i32_0 = arith.constant 0 : i32
    %c0_i32_1 = arith.constant 0 : i32
    return %c0_i32, %c0_i32_0 : i32, i32
  }
  func.func @transform_2(%arg0: i32, %arg1: i32) -> (i32, i32) {
    %c0_i32 = arith.constant 0 : i32
    %c0_i32_0 = arith.constant 0 : i32
    return %arg0, %c0_i32 : i32, i32
  }
  func.func @transform_3(%arg0: i32, %arg1: i32) -> (i32, i32) {
    %c0_i32 = arith.constant 0 : i32
    %c0_i32_0 = arith.constant 0 : i32
    %c0_i32_1 = arith.constant 0 : i32
    return %c0_i32, %c0_i32_0 : i32, i32
  }
  func.func @transform_4(%arg0: i32, %arg1: i32) -> (i32, i32) {
    %c0_i32 = arith.constant 0 : i32
    %c0_i32_0 = arith.constant 0 : i32
    return %arg0, %c0_i32 : i32, i32
  }
}

</mosaic_0001>

<llo_original>
// kernel: tpu_custom_call.1
$region0: #{tpu_custom_call.1}
  #allocation0 [shape = 'u32[]', space=smem, size = 0x4, offset = 0x4, fixed_abs, tag = 'smem constant byte address 0x4 - core index']
  #allocation1 [shape = 'u32[144,128]{1,0:T(1,128)}', space=vmem, size = 0x12000, scoped, tag = 'internal scratch']
  #allocation2 [shape = 'f32[128,128]{1,0:T(8,128)}', space=vmem, size = 0x10000, scoped, tag = 'scratch operand']
  %s0 = inlined_call_operand.hbm [shape: bf16[128,128], index: 0, kind: input, shape index: {}]
  %s1 = inlined_call_operand.hbm [shape: bf16[128,128], index: 1, kind: input, shape index: {}]
  %s2 = inlined_call_operand.hbm [shape: bf16[128,128], index: 2, kind: input, shape index: {}]
  %s3 = inlined_call_operand.hbm [shape: bf16[128,128], index: 3, kind: input, shape index: {}]
  %s4 = inlined_call_operand.hbm [shape: f32[128,128], index: 4, kind: output, shape index: {}]
  %s5 = sld [smem:[#allocation0]]
  $region50: #{tpu_custom_call.1} parent=0
    _
  %s7 = ssub.s32 1, %s5
  %s8 = scalar_select 0, %s7, %s5
  $region1: #{tpu_custom_call.1} parent=0
    #allocation3 [shape = 'u8[32768]{0}', space=vmem, size = 0x8000, scoped, tag = 'input window, operand 0, single buffered']
    #allocation4 [shape = 's32[1]{0}', space=sflag, size = 0x4, scoped, tag = 'scoped memory for tpu_custom_call.1']
    #allocation5 [shape = 's32[1]{0}', space=sflag, size = 0x4, scoped, tag = 'scoped memory for tpu_custom_call.1']
    #allocation6 [shape = 'u8[32768]{0}', space=vmem, size = 0x8000, scoped, tag = 'input window, operand 1, single buffered']
    #allocation7 [shape = 's32[1]{0}', space=sflag, size = 0x4, scoped, tag = 'scoped memory for tpu_custom_call.1']
    #allocation8 [shape = 'u8[32768]{0}', space=vmem, size = 0x8000, scoped, tag = 'input window, operand 2, single buffered']
    #allocation9 [shape = 'u8[32768]{0}', space=vmem, size = 0x8000, scoped, tag = 'input window, operand 3, single buffered']
    #allocation10 [shape = 's32[1]{0}', space=sflag, size = 0x4, scoped, tag = 'scoped memory for tpu_custom_call.1']
    #allocation11 [shape = 'u8[65536]{0}', space=vmem, size = 0x10000, scoped, tag = 'output window, operand 0, single buffered']
    %9 = vsyncpa [#allocation4], 0
    %10 = vsyncpa [#allocation7], 0
    %11 = vsyncpa [#allocation10], 0
    %12 = vsyncpa [#allocation5], 0
    // Predicated region
    $region2: #{tpu_custom_call.1} parent=1 // pred_check
      _
    $region3: #{tpu_custom_call.1} parent=1 // pred_check_branch
      %14 = sbr.rel (0) target = $region5
    $region4: #{tpu_custom_call.1} parent=1 // pred_region
      %s16 = ssub.s32 1024, 1024
      %17 = vsyncadd [#allocation4], %s16
      %s18 = sshll.u32 [#allocation3], 4
      %s19 = int_to_ptr.vmem [resolvable:$true] %s18
      %24 = dma.hbm_to_vmem [thread:$0]  %s0, 1024, %s19, [#allocation4], 64, 64, 4
    $region5: #{tpu_custom_call.1} parent=1 // pred_fallthru
      _
    // Predicated region
    $region6: #{tpu_custom_call.1} parent=1 // pred_check
      _
    $region7: #{tpu_custom_call.1} parent=1 // pred_check_branch
      %26 = sbr.rel (0) target = $region9
    $region8: #{tpu_custom_call.1} parent=1 // pred_region
      %s28 = ssub.s32 1024, 1024
      %29 = vsyncadd [#allocation7], %s28
      %s30 = sshll.u32 [#allocation6], 4
      %s31 = int_to_ptr.vmem [resolvable:$true] %s30
      %36 = dma.hbm_to_vmem [thread:$0]  %s1, 1024, %s31, [#allocation7], 64, 64, 4
    $region9: #{tpu_custom_call.1} parent=1 // pred_fallthru
      _
    // Predicated region
    $region10: #{tpu_custom_call.1} parent=1 // pred_check
      _
    $region11: #{tpu_custom_call.1} parent=1 // pred_check_branch
      %38 = sbr.rel (0) target = $region13
    $region12: #{tpu_custom_call.1} parent=1 // pred_region
      %s40 = ssub.s32 1024, 1024
      %41 = vsyncadd [#allocation7], %s40
      %s42 = sshll.u32 [#allocation8], 4
      %s43 = int_to_ptr.vmem [resolvable:$true] %s42
      %48 = dma.hbm_to_vmem [thread:$0]  %s2, 1024, %s43, [#allocation7], 64, 64, 4
    $region13: #{tpu_custom_call.1} parent=1 // pred_fallthru
      _
    // Predicated region
    $region14: #{tpu_custom_call.1} parent=1 // pred_check
      _
    $region15: #{tpu_custom_call.1} parent=1 // pred_check_branch
      %50 = sbr.rel (0) target = $region17
    $region16: #{tpu_custom_call.1} parent=1 // pred_region
      %s52 = ssub.s32 1024, 1024
      %53 = vsyncadd [#allocation10], %s52
      %s54 = sshll.u32 [#allocation9], 4
      %s55 = int_to_ptr.vmem [resolvable:$true] %s54
      %60 = dma.hbm_to_vmem [thread:$0]  %s3, 1024, %s55, [#allocation10], 64, 64, 4
    $region17: #{tpu_custom_call.1} parent=1 // pred_fallthru
      _
    // Predicated region
    $region18: #{tpu_custom_call.1} parent=1 // pred_check
      _
    $region19: #{tpu_custom_call.1} parent=1 // pred_check_branch
      %62 = sbr.rel (0) target = $region21
    $region20: #{tpu_custom_call.1} parent=1 // pred_region
      %63 = dma.done [#allocation4], 1024
    $region21: #{tpu_custom_call.1} parent=1 // pred_fallthru
      _
    // Predicated region
    $region22: #{tpu_custom_call.1} parent=1 // pred_check
      _
    $region23: #{tpu_custom_call.1} parent=1 // pred_check_branch
      %65 = sbr.rel (0) target = $region25
    $region24: #{tpu_custom_call.1} parent=1 // pred_region
      %66 = dma.done [#allocation7], 1024
    $region25: #{tpu_custom_call.1} parent=1 // pred_fallthru
      _
    // Predicated region
    $region26: #{tpu_custom_call.1} parent=1 // pred_check
      _
    $region27: #{tpu_custom_call.1} parent=1 // pred_check_branch
      %68 = sbr.rel (0) target = $region29
    $region28: #{tpu_custom_call.1} parent=1 // pred_region
      %69 = dma.done [#allocation7], 1024
    $region29: #{tpu_custom_call.1} parent=1 // pred_fallthru
      _
    // Predicated region
    $region30: #{tpu_custom_call.1} parent=1 // pred_check
      _
    $region31: #{tpu_custom_call.1} parent=1 // pred_check_branch
      %71 = sbr.rel (0) target = $region33
    $region32: #{tpu_custom_call.1} parent=1 // pred_region
      %72 = dma.done [#allocation10], 1024
    $region33: #{tpu_custom_call.1} parent=1 // pred_fallthru
      _
    %p74 = scmp.eq.s32.totalorder 0, 0
    // Predicated region
    $region34: #{tpu_custom_call.1} parent=1 // pred_check
      %p75 = pneg %p74
    $region35: #{tpu_custom_call.1} parent=1 // pred_check_branch
      %77 = sbr.rel (%p75) target = $region37
    $region36: #{tpu_custom_call.1} parent=1 // pred_region
      %78 = vst [vmem:[#allocation2] sm:$0xff] 0.0
      %79 = vst [vmem:[#allocation2 + $0x8] sm:$0xff] 0.0
      %80 = vst [vmem:[#allocation2 + $0x10] sm:$0xff] 0.0
      %81 = vst [vmem:[#allocation2 + $0x18] sm:$0xff] 0.0
      %82 = vst [vmem:[#allocation2 + $0x20] sm:$0xff] 0.0
      %83 = vst [vmem:[#allocation2 + $0x28] sm:$0xff] 0.0
      %84 = vst [vmem:[#allocation2 + $0x30] sm:$0xff] 0.0
      %85 = vst [vmem:[#allocation2 + $0x38] sm:$0xff] 0.0
      %86 = vst [vmem:[#allocation2 + $0x40] sm:$0xff] 0.0
      %87 = vst [vmem:[#allocation2 + $0x48] sm:$0xff] 0.0
      %88 = vst [vmem:[#allocation2 + $0x50] sm:$0xff] 0.0
      %89 = vst [vmem:[#allocation2 + $0x58] sm:$0xff] 0.0
      %90 = vst [vmem:[#allocation2 + $0x60] sm:$0xff] 0.0
      %91 = vst [vmem:[#allocation2 + $0x68] sm:$0xff] 0.0
      %92 = vst [vmem:[#allocation2 + $0x70] sm:$0xff] 0.0
      %93 = vst [vmem:[#allocation2 + $0x78] sm:$0xff] 0.0
    $region37: #{tpu_custom_call.1} parent=1 // pred_fallthru
      _
    %s94 = smul.u32 0, 128
    %s95 = sshra.s32 %s94, 3
    %s96 = sand.u32 %s94, 7
    %s97 = smul.addr %s95, 4
    %s98 = scalar_lea.vmem [#allocation6], %s97
    %v99 = vld [vmem:[%s98] sm:$0xf]
    %v100 = vld [vmem:[%s98 + $0x4] sm:$0xf]
    %v101 = vld [vmem:[%s98 + $0x8] sm:$0xf]
    %v102 = vld [vmem:[%s98 + $0xc] sm:$0xf]
    %v103 = vld [vmem:[%s98 + $0x10] sm:$0xf]
    %v104 = vld [vmem:[%s98 + $0x14] sm:$0xf]
    %v105 = vld [vmem:[%s98 + $0x18] sm:$0xf]
    %v106 = vld [vmem:[%s98 + $0x1c] sm:$0xf]
    %v107 = vld [vmem:[%s98 + $0x20] sm:$0xf]
    %v108 = vld [vmem:[%s98 + $0x24] sm:$0xf]
    %v109 = vld [vmem:[%s98 + $0x28] sm:$0xf]
    %v110 = vld [vmem:[%s98 + $0x2c] sm:$0xf]
    %v111 = vld [vmem:[%s98 + $0x30] sm:$0xf]
    %v112 = vld [vmem:[%s98 + $0x34] sm:$0xf]
    %v113 = vld [vmem:[%s98 + $0x38] sm:$0xf]
    %v114 = vld [vmem:[%s98 + $0x3c] sm:$0xf]
    %v115 = vld [vmem:[#allocation2] sm:$0xff]
    %v116 = vld [vmem:[#allocation2 + $0x8] sm:$0xff]
    %v117 = vld [vmem:[#allocation2 + $0x10] sm:$0xff]
    %v118 = vld [vmem:[#allocation2 + $0x18] sm:$0xff]
    %v119 = vld [vmem:[#allocation2 + $0x20] sm:$0xff]
    %v120 = vld [vmem:[#allocation2 + $0x28] sm:$0xff]
    %v121 = vld [vmem:[#allocation2 + $0x30] sm:$0xff]
    %v122 = vld [vmem:[#allocation2 + $0x38] sm:$0xff]
    %v123 = vld [vmem:[#allocation2 + $0x40] sm:$0xff]
    %v124 = vld [vmem:[#allocation2 + $0x48] sm:$0xff]
    %v125 = vld [vmem:[#allocation2 + $0x50] sm:$0xff]
    %v126 = vld [vmem:[#allocation2 + $0x58] sm:$0xff]
    %v127 = vld [vmem:[#allocation2 + $0x60] sm:$0xff]
    %v128 = vld [vmem:[#allocation2 + $0x68] sm:$0xff]
    %v129 = vld [vmem:[#allocation2 + $0x70] sm:$0xff]
    %v130 = vld [vmem:[#allocation2 + $0x78] sm:$0xff]
    %v131 = vld [vmem:[#allocation3] sm:$0xf]
    %v132 = vld [vmem:[#allocation3 + $0x4] sm:$0xf]
    %v133 = vld [vmem:[#allocation3 + $0x8] sm:$0xf]
    %v134 = vld [vmem:[#allocation3 + $0xc] sm:$0xf]
    %v135 = vld [vmem:[#allocation3 + $0x10] sm:$0xf]
    %v136 = vld [vmem:[#allocation3 + $0x14] sm:$0xf]
    %v137 = vld [vmem:[#allocation3 + $0x18] sm:$0xf]
    %v138 = vld [vmem:[#allocation3 + $0x1c] sm:$0xf]
    %v139 = vld [vmem:[#allocation3 + $0x20] sm:$0xf]
    %v140 = vld [vmem:[#allocation3 + $0x24] sm:$0xf]
    %v141 = vld [vmem:[#allocation3 + $0x28] sm:$0xf]
    %v142 = vld [vmem:[#allocation3 + $0x2c] sm:$0xf]
    %v143 = vld [vmem:[#allocation3 + $0x30] sm:$0xf]
    %v144 = vld [vmem:[#allocation3 + $0x34] sm:$0xf]
    %v145 = vld [vmem:[#allocation3 + $0x38] sm:$0xf]
    %v146 = vld [vmem:[#allocation3 + $0x3c] sm:$0xf]
    %v163 = vunpack.c.l.b16 %v131
    %v164 = vunpack.c.l.b16 %v132
    %v165 = vunpack.c.l.b16 %v133
    %v166 = vunpack.c.l.b16 %v134
    %v167 = vunpack.c.l.b16 %v135
    %v168 = vunpack.c.l.b16 %v136
    %v169 = vunpack.c.l.b16 %v137
    %v170 = vunpack.c.l.b16 %v138
    %v171 = vunpack.c.l.b16 %v139
    %v172 = vunpack.c.l.b16 %v140
    %v173 = vunpack.c.l.b16 %v141
    %v174 = vunpack.c.l.b16 %v142
    %v175 = vunpack.c.l.b16 %v143
    %v176 = vunpack.c.l.b16 %v144
    %v177 = vunpack.c.l.b16 %v145
    %v178 = vunpack.c.l.b16 %v146
    %v179 = vpack.c.b16 %v164, %v163
    %v180 = vpack.c.b16 %v166, %v165
    %v181 = vpack.c.b16 %v168, %v167
    %v182 = vpack.c.b16 %v170, %v169
    %v183 = vpack.c.b16 %v172, %v171
    %v184 = vpack.c.b16 %v174, %v173
    %v185 = vpack.c.b16 %v176, %v175
    %v186 = vpack.c.b16 %v178, %v177
    %v211 = vunpack.c.l.b16 %v99
    %v212 = vunpack.c.l.b16 %v100
    %v213 = vunpack.c.l.b16 %v101
    %v214 = vunpack.c.l.b16 %v102
    %v215 = vunpack.c.l.b16 %v103
    %v216 = vunpack.c.l.b16 %v104
    %v217 = vunpack.c.l.b16 %v105
    %v218 = vunpack.c.l.b16 %v106
    %v219 = vunpack.c.l.b16 %v107
    %v220 = vunpack.c.l.b16 %v108
    %v221 = vunpack.c.l.b16 %v109
    %v222 = vunpack.c.l.b16 %v110
    %v223 = vunpack.c.l.b16 %v111
    %v224 = vunpack.c.l.b16 %v112
    %v225 = vunpack.c.l.b16 %v113
    %v226 = vunpack.c.l.b16 %v114
    %v227 = vpack.c.b16 %v212, %v211
    %v228 = vpack.c.b16 %v214, %v213
    %v229 = vpack.c.b16 %v216, %v215
    %v230 = vpack.c.b16 %v218, %v217
    %v231 = vpack.c.b16 %v220, %v219
    %v232 = vpack.c.b16 %v222, %v221
    %v233 = vpack.c.b16 %v224, %v223
    %v234 = vpack.c.b16 %v226, %v225
    %243 = vmatprep.subr.bf16.mxu0 0
    %244 = vmatpush1.bf16.msra.mxu0 %v227
    %245 = vmatprep.subr.bf16.mxu0 0
    %246 = vmatpush1.bf16.msra.mxu0 %v228
    %247 = vmatprep.subr.bf16.mxu0 0
    %248 = vmatpush1.bf16.msra.mxu0 %v229
    %249 = vmatprep.subr.bf16.mxu0 0
    %250 = vmatpush1.bf16.msra.mxu0 %v230
    %251 = vmatprep.subr.bf16.mxu0 0
    %252 = vmatpush1.bf16.msra.mxu0 %v231
    %253 = vmatprep.subr.bf16.mxu0 0
    %254 = vmatpush1.bf16.msra.mxu0 %v232
    %255 = vmatprep.subr.bf16.mxu0 0
    %256 = vmatpush1.bf16.msra.mxu0 %v233
    %257 = vmatprep.subr.bf16.mxu0 0
    %258 = vmatpush1.bf16.msra.mxu0 %v234
    %259 = vmatprep.subr.bf16.mxu0 0
    %260 = vmatpush1.bf16.msra.mxu0 0
    %261 = vmatprep.subr.bf16.mxu0 0
    %262 = vmatpush1.bf16.msra.mxu0 0
    %263 = vmatprep.subr.bf16.mxu0 0
    %264 = vmatpush1.bf16.msra.mxu0 0
    %265 = vmatprep.subr.bf16.mxu0 0
    %266 = vmatpush1.bf16.msra.mxu0 0
    %267 = vmatprep.subr.bf16.mxu0 0
    %268 = vmatpush1.bf16.msra.mxu0 0
    %269 = vmatprep.subr.bf16.mxu0 0
    %270 = vmatpush1.bf16.msra.mxu0 0
    %271 = vmatprep.subr.bf16.mxu0 0
    %272 = vmatpush1.bf16.msra.mxu0 0
    %273 = vmatprep.subr.bf16.mxu0 0
    %274 = vmatpush1.bf16.msra.mxu0 0
    %275 = vmatprep.mubr.bf16.mxu0 0
    %276 = vmatmul.mubr.bf16.gmra.mrb[0].mxu0 %v179
    %v277 = vpop.f32.mrb[0].mxu0
    %v278 = vadd.f32 0.0, %v277
    %v279 = vpop.f32.mrb[0].mxu0
    %v280 = vpop.f32.mrb[0].mxu0
    %v281 = vadd.f32 0.0, %v280
    %v282 = vpop.f32.mrb[0].mxu0
    %283 = vmatprep.mubr.bf16.mxu0 0
    %284 = vmatmul.mubr.bf16.gmra.mrb[0].mxu0 %v180
    %v285 = vpop.f32.mrb[0].mxu0
    %v286 = vadd.f32 0.0, %v285
    %v287 = vpop.f32.mrb[0].mxu0
    %v288 = vpop.f32.mrb[0].mxu0
    %v289 = vadd.f32 0.0, %v288
    %v290 = vpop.f32.mrb[0].mxu0
    %291 = vmatprep.mubr.bf16.mxu0 0
    %292 = vmatmul.mubr.bf16.gmra.mrb[0].mxu0 %v181
    %v293 = vpop.f32.mrb[0].mxu0
    %v294 = vadd.f32 0.0, %v293
    %v295 = vpop.f32.mrb[0].mxu0
    %v296 = vpop.f32.mrb[0].mxu0
    %v297 = vadd.f32 0.0, %v296
    %v298 = vpop.f32.mrb[0].mxu0
    %299 = vmatprep.mubr.bf16.mxu0 0
    %300 = vmatmul.mubr.bf16.gmra.mrb[0].mxu0 %v182
    %v301 = vpop.f32.mrb[0].mxu0
    %v302 = vadd.f32 0.0, %v301
    %v303 = vpop.f32.mrb[0].mxu0
    %v304 = vpop.f32.mrb[0].mxu0
    %v305 = vadd.f32 0.0, %v304
    %v306 = vpop.f32.mrb[0].mxu0
    %307 = vmatprep.mubr.bf16.mxu0 0
    %308 = vmatmul.mubr.bf16.gmra.mrb[0].mxu0 %v183
    %v309 = vpop.f32.mrb[0].mxu0
    %v310 = vadd.f32 0.0, %v309
    %v311 = vpop.f32.mrb[0].mxu0
    %v312 = vpop.f32.mrb[0].mxu0
    %v313 = vadd.f32 0.0, %v312
    %v314 = vpop.f32.mrb[0].mxu0
    %315 = vmatprep.mubr.bf16.mxu0 0
    %316 = vmatmul.mubr.bf16.gmra.mrb[0].mxu0 %v184
    %v317 = vpop.f32.mrb[0].mxu0
    %v318 = vadd.f32 0.0, %v317
    %v319 = vpop.f32.mrb[0].mxu0
    %v320 = vpop.f32.mrb[0].mxu0
    %v321 = vadd.f32 0.0, %v320
    %v322 = vpop.f32.mrb[0].mxu0
    %323 = vmatprep.mubr.bf16.mxu0 0
    %324 = vmatmul.mubr.bf16.gmra.mrb[0].mxu0 %v185
    %v325 = vpop.f32.mrb[0].mxu0
    %v326 = vadd.f32 0.0, %v325
    %v327 = vpop.f32.mrb[0].mxu0
    %v328 = vpop.f32.mrb[0].mxu0
    %v329 = vadd.f32 0.0, %v328
    %v330 = vpop.f32.mrb[0].mxu0
    %331 = vmatprep.mubr.bf16.mxu0 0
    %332 = vmatmul.mubr.bf16.gmra.mrb[0].mxu0 %v186
    %v333 = vpop.f32.mrb[0].mxu0
    %v334 = vadd.f32 0.0, %v333
    %v335 = vpop.f32.mrb[0].mxu0
    %v336 = vpop.f32.mrb[0].mxu0
    %v337 = vadd.f32 0.0, %v336
    %v338 = vpop.f32.mrb[0].mxu0
    %339 = vdwg.mxu0
    %v340 = vadd.f32 %v115, %v278
    %v341 = vadd.f32 %v116, %v281
    %v342 = vadd.f32 %v117, %v286
    %v343 = vadd.f32 %v118, %v289
    %v344 = vadd.f32 %v119, %v294
    %v345 = vadd.f32 %v120, %v297
    %v346 = vadd.f32 %v121, %v302
    %v347 = vadd.f32 %v122, %v305
    %v348 = vadd.f32 %v123, %v310
    %v349 = vadd.f32 %v124, %v313
    %v350 = vadd.f32 %v125, %v318
    %v351 = vadd.f32 %v126, %v321
    %v352 = vadd.f32 %v127, %v326
    %v353 = vadd.f32 %v128, %v329
    %v354 = vadd.f32 %v129, %v334
    %v355 = vadd.f32 %v130, %v337
    %356 = vst [vmem:[#allocation2] sm:$0xff] %v340
    %357 = vst [vmem:[#allocation2 + $0x8] sm:$0xff] %v341
    %358 = vst [vmem:[#allocation2 + $0x10] sm:$0xff] %v342
    %359 = vst [vmem:[#allocation2 + $0x18] sm:$0xff] %v343
    %360 = vst [vmem:[#allocation2 + $0x20] sm:$0xff] %v344
    %361 = vst [vmem:[#allocation2 + $0x28] sm:$0xff] %v345
    %362 = vst [vmem:[#allocation2 + $0x30] sm:$0xff] %v346
    %363 = vst [vmem:[#allocation2 + $0x38] sm:$0xff] %v347
    %364 = vst [vmem:[#allocation2 + $0x40] sm:$0xff] %v348
    %365 = vst [vmem:[#allocation2 + $0x48] sm:$0xff] %v349
    %366 = vst [vmem:[#allocation2 + $0x50] sm:$0xff] %v350
    %367 = vst [vmem:[#allocation2 + $0x58] sm:$0xff] %v351
    %368 = vst [vmem:[#allocation2 + $0x60] sm:$0xff] %v352
    %369 = vst [vmem:[#allocation2 + $0x68] sm:$0xff] %v353
    %370 = vst [vmem:[#allocation2 + $0x70] sm:$0xff] %v354
    %371 = vst [vmem:[#allocation2 + $0x78] sm:$0xff] %v355
    // Predicated region
    $region38: #{tpu_custom_call.1} parent=1 // pred_check
      %p372 = pneg %p74
    $region39: #{tpu_custom_call.1} parent=1 // pred_check_branch
      %374 = sbr.rel (%p372) target = $region41
    $region40: #{tpu_custom_call.1} parent=1 // pred_region
      %v375 = vld [vmem:[#allocation2] sm:$0xff]
      %v376 = vld [vmem:[#allocation2 + $0x8] sm:$0xff]
      %v377 = vld [vmem:[#allocation2 + $0x10] sm:$0xff]
      %v378 = vld [vmem:[#allocation2 + $0x18] sm:$0xff]
      %v379 = vld [vmem:[#allocation2 + $0x20] sm:$0xff]
      %v380 = vld [vmem:[#allocation2 + $0x28] sm:$0xff]
      %v381 = vld [vmem:[#allocation2 + $0x30] sm:$0xff]
      %v382 = vld [vmem:[#allocation2 + $0x38] sm:$0xff]
      %v383 = vld [vmem:[#allocation2 + $0x40] sm:$0xff]
      %v384 = vld [vmem:[#allocation2 + $0x48] sm:$0xff]
      %v385 = vld [vmem:[#allocation2 + $0x50] sm:$0xff]
      %v386 = vld [vmem:[#allocation2 + $0x58] sm:$0xff]
      %v387 = vld [vmem:[#allocation2 + $0x60] sm:$0xff]
      %v388 = vld [vmem:[#allocation2 + $0x68] sm:$0xff]
      %v389 = vld [vmem:[#allocation2 + $0x70] sm:$0xff]
      %v390 = vld [vmem:[#allocation2 + $0x78] sm:$0xff]
      %v391 = vmul.f32 %v375, 0.9
      %v392 = vmul.f32 %v376, 0.9
      %v393 = vmul.f32 %v377, 0.9
      %v394 = vmul.f32 %v378, 0.9
      %v395 = vmul.f32 %v379, 0.9
      %v396 = vmul.f32 %v380, 0.9
      %v397 = vmul.f32 %v381, 0.9
      %v398 = vmul.f32 %v382, 0.9
      %v399 = vmul.f32 %v383, 0.9
      %v400 = vmul.f32 %v384, 0.9
      %v401 = vmul.f32 %v385, 0.9
      %v402 = vmul.f32 %v386, 0.9
      %v403 = vmul.f32 %v387, 0.9
      %v404 = vmul.f32 %v388, 0.9
      %v405 = vmul.f32 %v389, 0.9
      %v406 = vmul.f32 %v390, 0.9
      %v407 = vld [vmem:[#allocation8] sm:$0xf]
      %v408 = vld [vmem:[#allocation8 + $0x4] sm:$0xf]
      %v409 = vld [vmem:[#allocation8 + $0x8] sm:$0xf]
      %v410 = vld [vmem:[#allocation8 + $0xc] sm:$0xf]
      %v411 = vld [vmem:[#allocation8 + $0x10] sm:$0xf]
      %v412 = vld [vmem:[#allocation8 + $0x14] sm:$0xf]
      %v413 = vld [vmem:[#allocation8 + $0x18] sm:$0xf]
      %v414 = vld [vmem:[#allocation8 + $0x1c] sm:$0xf]
      %v415 = vld [vmem:[#allocation8 + $0x20] sm:$0xf]
      %v416 = vld [vmem:[#allocation8 + $0x24] sm:$0xf]
      %v417 = vld [vmem:[#allocation8 + $0x28] sm:$0xf]
      %v418 = vld [vmem:[#allocation8 + $0x2c] sm:$0xf]
      %v419 = vld [vmem:[#allocation8 + $0x30] sm:$0xf]
      %v420 = vld [vmem:[#allocation8 + $0x34] sm:$0xf]
      %v421 = vld [vmem:[#allocation8 + $0x38] sm:$0xf]
      %v422 = vld [vmem:[#allocation8 + $0x3c] sm:$0xf]
      %v423 = vunpack.c.l.bf16 %v407
      %v424 = vunpack.c.l.bf16 %v408
      %v425 = vunpack.c.l.bf16 %v409
      %v426 = vunpack.c.l.bf16 %v410
      %v427 = vunpack.c.l.bf16 %v411
      %v428 = vunpack.c.l.bf16 %v412
      %v429 = vunpack.c.l.bf16 %v413
      %v430 = vunpack.c.l.bf16 %v414
      %v431 = vunpack.c.l.bf16 %v415
      %v432 = vunpack.c.l.bf16 %v416
      %v433 = vunpack.c.l.bf16 %v417
      %v434 = vunpack.c.l.bf16 %v418
      %v435 = vunpack.c.l.bf16 %v419
      %v436 = vunpack.c.l.bf16 %v420
      %v437 = vunpack.c.l.bf16 %v421
      %v438 = vunpack.c.l.bf16 %v422
      %v439 = vmul.f32 %v423, 0.1
      %v440 = vmul.f32 %v424, 0.1
      %v441 = vmul.f32 %v425, 0.1
      %v442 = vmul.f32 %v426, 0.1
      %v443 = vmul.f32 %v427, 0.1
      %v444 = vmul.f32 %v428, 0.1
      %v445 = vmul.f32 %v429, 0.1
      %v446 = vmul.f32 %v430, 0.1
      %v447 = vmul.f32 %v431, 0.1
      %v448 = vmul.f32 %v432, 0.1
      %v449 = vmul.f32 %v433, 0.1
      %v450 = vmul.f32 %v434, 0.1
      %v451 = vmul.f32 %v435, 0.1
      %v452 = vmul.f32 %v436, 0.1
      %v453 = vmul.f32 %v437, 0.1
      %v454 = vmul.f32 %v438, 0.1
      %v455 = vadd.f32 %v391, %v439
      %v456 = vadd.f32 %v392, %v440
      %v457 = vadd.f32 %v393, %v441
      %v458 = vadd.f32 %v394, %v442
      %v459 = vadd.f32 %v395, %v443
      %v460 = vadd.f32 %v396, %v444
      %v461 = vadd.f32 %v397, %v445
      %v462 = vadd.f32 %v398, %v446
      %v463 = vadd.f32 %v399, %v447
      %v464 = vadd.f32 %v400, %v448
      %v465 = vadd.f32 %v401, %v449
      %v466 = vadd.f32 %v402, %v450
      %v467 = vadd.f32 %v403, %v451
      %v468 = vadd.f32 %v404, %v452
      %v469 = vadd.f32 %v405, %v453
      %v470 = vadd.f32 %v406, %v454
      %v471 = vpack.c.bf16 %v456, %v455
      %v472 = vpack.c.bf16 %v458, %v457
      %v473 = vpack.c.bf16 %v460, %v459
      %v474 = vpack.c.bf16 %v462, %v461
      %v475 = vpack.c.bf16 %v464, %v463
      %v476 = vpack.c.bf16 %v466, %v465
      %v477 = vpack.c.bf16 %v468, %v467
      %v478 = vpack.c.bf16 %v470, %v469
      %v479 = vld [vmem:[#allocation9] sm:$0xf]
      %v480 = vld [vmem:[#allocation9 + $0x4] sm:$0xf]
      %v481 = vld [vmem:[#allocation9 + $0x8] sm:$0xf]
      %v482 = vld [vmem:[#allocation9 + $0xc] sm:$0xf]
      %v483 = vld [vmem:[#allocation9 + $0x10] sm:$0xf]
      %v484 = vld [vmem:[#allocation9 + $0x14] sm:$0xf]
      %v485 = vld [vmem:[#allocation9 + $0x18] sm:$0xf]
      %v486 = vld [vmem:[#allocation9 + $0x1c] sm:$0xf]
      %v487 = vld [vmem:[#allocation9 + $0x20] sm:$0xf]
      %v488 = vld [vmem:[#allocation9 + $0x24] sm:$0xf]
      %v489 = vld [vmem:[#allocation9 + $0x28] sm:$0xf]
      %v490 = vld [vmem:[#allocation9 + $0x2c] sm:$0xf]
      %v491 = vld [vmem:[#allocation9 + $0x30] sm:$0xf]
      %v492 = vld [vmem:[#allocation9 + $0x34] sm:$0xf]
      %v493 = vld [vmem:[#allocation9 + $0x38] sm:$0xf]
      %v494 = vld [vmem:[#allocation9 + $0x3c] sm:$0xf]
      %v511 = vunpack.c.l.b16 %v479
      %v512 = vunpack.c.l.b16 %v480
      %v513 = vunpack.c.l.b16 %v481
      %v514 = vunpack.c.l.b16 %v482
      %v515 = vunpack.c.l.b16 %v483
      %v516 = vunpack.c.l.b16 %v484
      %v517 = vunpack.c.l.b16 %v485
      %v518 = vunpack.c.l.b16 %v486
      %v519 = vunpack.c.l.b16 %v487
      %v520 = vunpack.c.l.b16 %v488
      %v521 = vunpack.c.l.b16 %v489
      %v522 = vunpack.c.l.b16 %v490
      %v523 = vunpack.c.l.b16 %v491
      %v524 = vunpack.c.l.b16 %v492
      %v525 = vunpack.c.l.b16 %v493
      %v526 = vunpack.c.l.b16 %v494
      %v527 = vpack.c.b16 %v512, %v511
      %v528 = vpack.c.b16 %v514, %v513
      %v529 = vpack.c.b16 %v516, %v515
      %v530 = vpack.c.b16 %v518, %v517
      %v531 = vpack.c.b16 %v520, %v519
      %v532 = vpack.c.b16 %v522, %v521
      %v533 = vpack.c.b16 %v524, %v523
      %v534 = vpack.c.b16 %v526, %v525
      %543 = vmatprep.subr.bf16.mxu0 0
      %544 = vmatpush1.bf16.msra.mxu0 %v527
      %545 = vmatprep.subr.bf16.mxu0 0
      %546 = vmatpush1.bf16.msra.mxu0 %v528
      %547 = vmatprep.subr.bf16.mxu0 0
      %548 = vmatpush1.bf16.msra.mxu0 %v529
      %549 = vmatprep.subr.bf16.mxu0 0
      %550 = vmatpush1.bf16.msra.mxu0 %v530
      %551 = vmatprep.subr.bf16.mxu0 0
      %552 = vmatpush1.bf16.msra.mxu0 %v531
      %553 = vmatprep.subr.bf16.mxu0 0
      %554 = vmatpush1.bf16.msra.mxu0 %v532
      %555 = vmatprep.subr.bf16.mxu0 0
      %556 = vmatpush1.bf16.msra.mxu0 %v533
      %557 = vmatprep.subr.bf16.mxu0 0
      %558 = vmatpush1.bf16.msra.mxu0 %v534
      %559 = vmatprep.subr.bf16.mxu0 0
      %560 = vmatpush1.bf16.msra.mxu0 0
      %561 = vmatprep.subr.bf16.mxu0 0
      %562 = vmatpush1.bf16.msra.mxu0 0
      %563 = vmatprep.subr.bf16.mxu0 0
      %564 = vmatpush1.bf16.msra.mxu0 0
      %565 = vmatprep.subr.bf16.mxu0 0
      %566 = vmatpush1.bf16.msra.mxu0 0
      %567 = vmatprep.subr.bf16.mxu0 0
      %568 = vmatpush1.bf16.msra.mxu0 0
      %569 = vmatprep.subr.bf16.mxu0 0
      %570 = vmatpush1.bf16.msra.mxu0 0
      %571 = vmatprep.subr.bf16.mxu0 0
      %572 = vmatpush1.bf16.msra.mxu0 0
      %573 = vmatprep.subr.bf16.mxu0 0
      %574 = vmatpush1.bf16.msra.mxu0 0
      %575 = vmatprep.mubr.bf16.mxu0 0
      %576 = vmatmul.mubr.bf16.gmra.mrb[0].mxu0 %v471
      %v577 = vpop.f32.mrb[0].mxu0
      %v578 = vadd.f32 0.0, %v577
      %v579 = vpop.f32.mrb[0].mxu0
      %v580 = vpop.f32.mrb[0].mxu0
      %v581 = vadd.f32 0.0, %v580
      %v582 = vpop.f32.mrb[0].mxu0
      %583 = vmatprep.mubr.bf16.mxu0 0
      %584 = vmatmul.mubr.bf16.gmra.mrb[0].mxu0 %v472
      %v585 = vpop.f32.mrb[0].mxu0
      %v586 = vadd.f32 0.0, %v585
      %v587 = vpop.f32.mrb[0].mxu0
      %v588 = vpop.f32.mrb[0].mxu0
      %v589 = vadd.f32 0.0, %v588
      %v590 = vpop.f32.mrb[0].mxu0
      %591 = vmatprep.mubr.bf16.mxu0 0
      %592 = vmatmul.mubr.bf16.gmra.mrb[0].mxu0 %v473
      %v593 = vpop.f32.mrb[0].mxu0
      %v594 = vadd.f32 0.0, %v593
      %v595 = vpop.f32.mrb[0].mxu0
      %v596 = vpop.f32.mrb[0].mxu0
      %v597 = vadd.f32 0.0, %v596
      %v598 = vpop.f32.mrb[0].mxu0
      %599 = vmatprep.mubr.bf16.mxu0 0
      %600 = vmatmul.mubr.bf16.gmra.mrb[0].mxu0 %v474
      %v601 = vpop.f32.mrb[0].mxu0
      %v602 = vadd.f32 0.0, %v601
      %v603 = vpop.f32.mrb[0].mxu0
      %v604 = vpop.f32.mrb[0].mxu0
      %v605 = vadd.f32 0.0, %v604
      %v606 = vpop.f32.mrb[0].mxu0
      %607 = vmatprep.mubr.bf16.mxu0 0
      %608 = vmatmul.mubr.bf16.gmra.mrb[0].mxu0 %v475
      %v609 = vpop.f32.mrb[0].mxu0
      %v610 = vadd.f32 0.0, %v609
      %v611 = vpop.f32.mrb[0].mxu0
      %v612 = vpop.f32.mrb[0].mxu0
      %v613 = vadd.f32 0.0, %v612
      %v614 = vpop.f32.mrb[0].mxu0
      %615 = vmatprep.mubr.bf16.mxu0 0
      %616 = vmatmul.mubr.bf16.gmra.mrb[0].mxu0 %v476
      %v617 = vpop.f32.mrb[0].mxu0
      %v618 = vadd.f32 0.0, %v617
      %v619 = vpop.f32.mrb[0].mxu0
      %v620 = vpop.f32.mrb[0].mxu0
      %v621 = vadd.f32 0.0, %v620
      %v622 = vpop.f32.mrb[0].mxu0
      %623 = vmatprep.mubr.bf16.mxu0 0
      %624 = vmatmul.mubr.bf16.gmra.mrb[0].mxu0 %v477
      %v625 = vpop.f32.mrb[0].mxu0
      %v626 = vadd.f32 0.0, %v625
      %v627 = vpop.f32.mrb[0].mxu0
      %v628 = vpop.f32.mrb[0].mxu0
      %v629 = vadd.f32 0.0, %v628
      %v630 = vpop.f32.mrb[0].mxu0
      %631 = vmatprep.mubr.bf16.mxu0 0
      %632 = vmatmul.mubr.bf16.gmra.mrb[0].mxu0 %v478
      %v633 = vpop.f32.mrb[0].mxu0
      %v634 = vadd.f32 0.0, %v633
      %v635 = vpop.f32.mrb[0].mxu0
      %v636 = vpop.f32.mrb[0].mxu0
      %v637 = vadd.f32 0.0, %v636
      %v638 = vpop.f32.mrb[0].mxu0
      %639 = vdwg.mxu0
      %v640 = vmul.f32 %v578, 0.4054651
      %v641 = vmul.f32 %v581, 0.4054651
      %v642 = vmul.f32 %v586, 0.4054651
      %v643 = vmul.f32 %v589, 0.4054651
      %v644 = vmul.f32 %v594, 0.4054651
      %v645 = vmul.f32 %v597, 0.4054651
      %v646 = vmul.f32 %v602, 0.4054651
      %v647 = vmul.f32 %v605, 0.4054651
      %v648 = vmul.f32 %v610, 0.4054651
      %v649 = vmul.f32 %v613, 0.4054651
      %v650 = vmul.f32 %v618, 0.4054651
      %v651 = vmul.f32 %v621, 0.4054651
      %v652 = vmul.f32 %v626, 0.4054651
      %v653 = vmul.f32 %v629, 0.4054651
      %v654 = vmul.f32 %v634, 0.4054651
      %v655 = vmul.f32 %v637, 0.4054651
      %v656 = vmul.f32 %v455, 0.5945349
      %v657 = vmul.f32 %v456, 0.5945349
      %v658 = vmul.f32 %v457, 0.5945349
      %v659 = vmul.f32 %v458, 0.5945349
      %v660 = vmul.f32 %v459, 0.5945349
      %v661 = vmul.f32 %v460, 0.5945349
      %v662 = vmul.f32 %v461, 0.5945349
      %v663 = vmul.f32 %v462, 0.5945349
      %v664 = vmul.f32 %v463, 0.5945349
      %v665 = vmul.f32 %v464, 0.5945349
      %v666 = vmul.f32 %v465, 0.5945349
      %v667 = vmul.f32 %v466, 0.5945349
      %v668 = vmul.f32 %v467, 0.5945349
      %v669 = vmul.f32 %v468, 0.5945349
      %v670 = vmul.f32 %v469, 0.5945349
      %v671 = vmul.f32 %v470, 0.5945349
      %v672 = vadd.f32 %v640, %v656
      %v673 = vadd.f32 %v641, %v657
      %v674 = vadd.f32 %v642, %v658
      %v675 = vadd.f32 %v643, %v659
      %v676 = vadd.f32 %v644, %v660
      %v677 = vadd.f32 %v645, %v661
      %v678 = vadd.f32 %v646, %v662
      %v679 = vadd.f32 %v647, %v663
      %v680 = vadd.f32 %v648, %v664
      %v681 = vadd.f32 %v649, %v665
      %v682 = vadd.f32 %v650, %v666
      %v683 = vadd.f32 %v651, %v667
      %v684 = vadd.f32 %v652, %v668
      %v685 = vadd.f32 %v653, %v669
      %v686 = vadd.f32 %v654, %v670
      %v687 = vadd.f32 %v655, %v671
      %688 = vst [vmem:[#allocation11] sm:$0xff] %v672
      %689 = vst [vmem:[#allocation11 + $0x8] sm:$0xff] %v673
      %690 = vst [vmem:[#allocation11 + $0x10] sm:$0xff] %v674
      %691 = vst [vmem:[#allocation11 + $0x18] sm:$0xff] %v675
      %692 = vst [vmem:[#allocation11 + $0x20] sm:$0xff] %v676
      %693 = vst [vmem:[#allocation11 + $0x28] sm:$0xff] %v677
      %694 = vst [vmem:[#allocation11 + $0x30] sm:$0xff] %v678
      %695 = vst [vmem:[#allocation11 + $0x38] sm:$0xff] %v679
      %696 = vst [vmem:[#allocation11 + $0x40] sm:$0xff] %v680
      %697 = vst [vmem:[#allocation11 + $0x48] sm:$0xff] %v681
      %698 = vst [vmem:[#allocation11 + $0x50] sm:$0xff] %v682
      %699 = vst [vmem:[#allocation11 + $0x58] sm:$0xff] %v683
      %700 = vst [vmem:[#allocation11 + $0x60] sm:$0xff] %v684
      %701 = vst [vmem:[#allocation11 + $0x68] sm:$0xff] %v685
      %702 = vst [vmem:[#allocation11 + $0x70] sm:$0xff] %v686
      %703 = vst [vmem:[#allocation11 + $0x78] sm:$0xff] %v687
    $region41: #{tpu_custom_call.1} parent=1 // pred_fallthru
      _
    // Predicated region
    $region42: #{tpu_custom_call.1} parent=1 // pred_check
      _
    $region43: #{tpu_custom_call.1} parent=1 // pred_check_branch
      %705 = sbr.rel (0) target = $region45
    $region44: #{tpu_custom_call.1} parent=1 // pred_region
      %s707 = ssub.s32 2048, 2048
      %708 = vsyncadd [#allocation5], %s707
      %s709 = sshll.u32 [#allocation11], 4
      %s710 = int_to_ptr.vmem [resolvable:$true] %s709
      %715 = dma.vmem_to_hbm [thread:$0]  %s710, 2048, %s4, [#allocation5], 128, 128, 8
    $region45: #{tpu_custom_call.1} parent=1 // pred_fallthru
      _
    // Predicated region
    $region46: #{tpu_custom_call.1} parent=1 // pred_check
      _
    $region47: #{tpu_custom_call.1} parent=1 // pred_check_branch
      %717 = sbr.rel (0) target = $region49
    $region48: #{tpu_custom_call.1} parent=1 // pred_region
      %718 = dma.done [#allocation5], 2048
    $region49: #{tpu_custom_call.1} parent=1 // pred_fallthru
      _
    %719 = vsyncpa [#allocation4], 1
    %720 = vsyncpa [#allocation7], 1
    %721 = vsyncpa [#allocation10], 1
    %722 = vsyncpa [#allocation5], 1

</llo_original>
